<compile_context>
chip_gen: v5e
topology: v5e:2x2
jax: 0.10.0
libtpu: 0.0.40
codegen_flags: <defaults>
</compile_context>

<pallas_src>
import functools
import inspect

import jax
import jax.numpy as jnp
from jax.experimental import pallas as pl
from jax.experimental.pallas import tpu as pltpu

INPUT_SIZE = 256
HIDDEN = 200
OUTPUT_SIZE = 10
W_PAD = 128          # lane-dense width for the folded weight / in-kernel softmax
NEG_BIG = -1e30      # padded-logit bias -> exp underflows to exactly 0

try:
    _HAS_PIPELINE_MODE = "pipeline_mode" in inspect.signature(pl.BlockSpec).parameters
except (TypeError, ValueError):  # pragma: no cover - very old/odd BlockSpec impls
    _HAS_PIPELINE_MODE = False


def _fused_mlp_softmax_kernel(x_ref, w_ref, b_ref, o_ref):
    # In-kernel f32 -> bf16 cast of the activations (cheap VPU op, hidden under DMA).
    x = x_ref[...].astype(jnp.bfloat16)
    # Single folded matmul: [tb,256]bf16 @ [256,128]bf16, f32 MXU accumulation.
    logits = jnp.dot(x, w_ref[...], preferred_element_type=jnp.float32)
    logits = logits + b_ref[...]                       # padded cols get -1e30
    # Softmax over the 128 lanes; padded columns contribute exactly 0 to the sum.
    m = jnp.max(logits, axis=-1, keepdims=True)
    e = jnp.exp(logits - m)
    denom = jnp.sum(e, axis=-1, keepdims=True)
    inv = pl.reciprocal(denom, approx=True)            # EUP vrcp (free slot)
    # Narrow writeback: only the 10 real output columns go back to HBM.
    o_ref[...] = (e[:, :OUTPUT_SIZE] * inv).astype(o_ref.dtype)


def _fold_params(w1, b1, w2, b2):
    """fc2(fc1(x)) == x @ (w1 @ w2) + (b1 @ w2 + b2) since there is no activation."""
    w = jnp.dot(w1, w2, preferred_element_type=jnp.float32)       # [256, 10]
    b = jnp.dot(b1, w2, preferred_element_type=jnp.float32) + b2  # [1, 10]
    # Pad feature dim to 128 lanes: zero weight columns, -1e30 bias columns.
    w_pad = jnp.zeros((INPUT_SIZE, W_PAD), jnp.float32).at[:, :OUTPUT_SIZE].set(w)
    b_pad = jnp.full((1, W_PAD), NEG_BIG, jnp.float32).at[:, :OUTPUT_SIZE].set(b)
    return w_pad.astype(jnp.bfloat16), b_pad


def _pick_tile(B: int, tb: int) -> int:
    """Batch tile: sublane-aligned, and an even tile count so both v7x TCs work."""
    if B <= 16:
        return B                       # single full-extent block (exact last dims)
    n = -(-B // tb)                    # ceil
    if n % 2:
        n += 1                         # even number of tiles -> megacore-friendly
    t = -(-B // n)
    t = -(-t // 8) * 8                 # rows multiple of 8 (sublane alignment)
    return min(t, B)


@functools.partial(jax.jit, static_argnames=("tb",))
def neural_model_forward(x, w1, b1, w2, b2, *, tb=1024):
    """x: [B, 256] float32. Weights stored as (in, out); biases as (1, out)."""
    B = x.shape[0]
    w_pad, b_pad = _fold_params(w1, b1, w2, b2)

    tb = _pick_tile(B, tb)
    n_tiles = -(-B // tb)              # ragged last block handled by Pallas masking

    x_spec_kwargs = {}
    if _HAS_PIPELINE_MODE and n_tiles >= 4:
        # Deeper input buffering helps hide DMA latency on long streaming grids.
        x_spec_kwargs["pipeline_mode"] = pl.Buffered(3)

    out = pl.pallas_call(
        _fused_mlp_softmax_kernel,
        out_shape=jax.ShapeDtypeStruct((B, OUTPUT_SIZE), jnp.float32),
        grid_spec=pltpu.PrefetchScalarGridSpec(
            num_scalar_prefetch=0,
            grid=(n_tiles,),
            in_specs=[
                pl.BlockSpec((tb, INPUT_SIZE), lambda i: (i, 0), **x_spec_kwargs),
                pl.BlockSpec((INPUT_SIZE, W_PAD), lambda i: (0, 0)),  # resident W
                pl.BlockSpec((1, W_PAD), lambda i: (0, 0)),           # resident b
            ],
            # Full last dim (10) satisfies the (8,128) rule; masked vst, far fewer bytes.
            out_specs=pl.BlockSpec((tb, OUTPUT_SIZE), lambda i: (i, 0)),
        ),
        compiler_params=pltpu.CompilerParams(
            dimension_semantics=("parallel",),   # megacore sharding on v7x
        ),
    )(x, w_pad, b_pad)

    return out


def init_params(key):
    """Deterministic init mimicking nn.Linear's U(-1/sqrt(fan_in), 1/sqrt(fan_in))."""
    k1, k2, k3, k4 = jax.random.split(key, 4)
    bound1 = 1.0 / jnp.sqrt(jnp.float32(INPUT_SIZE))
    bound2 = 1.0 / jnp.sqrt(jnp.float32(HIDDEN))
    # stored transposed relative to PyTorch: (in_features, out_features)
    w1 = jax.random.uniform(k1, (INPUT_SIZE, HIDDEN), jnp.float32, -bound1, bound1)
    b1 = jax.random.uniform(k2, (1, HIDDEN), jnp.float32, -bound1, bound1)
    w2 = jax.random.uniform(k3, (HIDDEN, OUTPUT_SIZE), jnp.float32, -bound2, bound2)
    b2 = jax.random.uniform(k4, (1, OUTPUT_SIZE), jnp.float32, -bound2, bound2)
    return w1, b1, w2, b2


def reference_forward_f32(x, w1, b1, w2, b2):
    """Module-equivalent math: two f32 linear layers + softmax (no fold, no bf16)."""
    logits = (x @ w1 + b1) @ w2 + b2
    return jax.nn.softmax(logits, axis=-1)


def reference_forward_matched(x, w1, b1, w2, b2):
    """Same numerics as the kernel (folded bf16 weights, f32 accum, exact softmax)."""
    w = jnp.dot(w1, w2).astype(jnp.bfloat16)
    b = jnp.dot(b1, w2) + b2
    logits = jnp.dot(x.astype(jnp.bfloat16), w,
                     preferred_element_type=jnp.float32) + b
    return jax.nn.softmax(logits, axis=-1)


def _check(B, kx, params, *, tb=1024):
    w1, b1, w2, b2 = params
    # mirrors torch.randint(0, 100, (B, 256)).float()
    x = jax.random.randint(kx, (B, INPUT_SIZE), 0, 100).astype(jnp.float32)

    out = jax.block_until_ready(neural_model_forward(x, w1, b1, w2, b2, tb=tb))
    assert out.shape == (B, OUTPUT_SIZE)
    assert bool(jnp.all(jnp.isfinite(out)))

    ref_m = reference_forward_matched(x, w1, b1, w2, b2)
    ref_f = reference_forward_f32(x, w1, b1, w2, b2)

    # Raw output: tolerance covers the approximate EUP reciprocal.
    assert jnp.allclose(out, ref_m, atol=5e-3)
    assert jnp.allclose(jnp.sum(out, axis=-1), 1.0, atol=5e-3)
    # Renormalizing cancels the approx reciprocal -> tight matmul/softmax check.
    out_rn = out / jnp.sum(out, axis=-1, keepdims=True)
    assert jnp.allclose(out_rn, ref_m, atol=1e-4)
    # Loose end-to-end check vs the unfused, full-f32 module-equivalent math.
    assert jnp.allclose(out, ref_f, atol=1e-1)


if __name__ == "__main__":
    key = jax.random.PRNGKey(0)
    kx, kp = jax.random.split(key)
    params = init_params(kp)

    k1, k2, k3 = jax.random.split(kx, 3)
    _check(1, k1, params)              # module's example shape: x = (1, 256)
    _check(100, k2, params)            # 2 even tiles + ragged, masked last block
    _check(600, k3, params, tb=128)    # long grid: exercises Buffered(3) x pipeline
    print("KERNEL_OK")
</pallas_src>

<mosaic_0001>
module attributes {stable_mosaic.version = 11 : i64} {
  func.func @_fused_mlp_softmax_kernel(%arg0: i32, %arg1: memref<1x256xf32, #tpu.memory_space<vmem>>, %arg2: memref<256x128xbf16, #tpu.memory_space<vmem>>, %arg3: memref<1x128xf32, #tpu.memory_space<vmem>>, %arg4: memref<1x10xf32, #tpu.memory_space<vmem>>) attributes {dimension_semantics = [#tpu.dimension_semantics<parallel>], iteration_bounds = array<i64: 1>, scalar_prefetch = 0 : i64, scratch_operands = 0 : i64, tpu.core_type = #tpu.core_type<tc>, window_params = [{transform_indices = @transform_0, window_bounds = array<i64: 1, 256>}, {pipeline_mode = #tpu.pipeline_mode<synchronous>, transform_indices = @transform_1, window_bounds = array<i64: 256, 128>}, {pipeline_mode = #tpu.pipeline_mode<synchronous>, transform_indices = @transform_2, window_bounds = array<i64: 1, 128>}, {transform_indices = @transform_3, window_bounds = array<i64: 1, 10>}]} {
    %c0 = arith.constant 0 : index
    %c0_0 = arith.constant 0 : index
    %0 = vector.load %arg1[%c0, %c0_0] : memref<1x256xf32, #tpu.memory_space<vmem>>, vector<1x256xf32>
    %1 = arith.truncf %0 : vector<1x256xf32> to vector<1x256xbf16>
    %c0_1 = arith.constant 0 : index
    %c0_2 = arith.constant 0 : index
    %2 = vector.load %arg2[%c0_1, %c0_2] : memref<256x128xbf16, #tpu.memory_space<vmem>>, vector<256x128xbf16>
    %cst = arith.constant dense<0.000000e+00> : vector<1x128xf32>
    %3 = tpu.matmul %1, %2, %cst {dimension_numbers = #tpu.dot_dimension_numbers<[1], [0], [0], [1], [0, 0, 1, 1], [], []>} : vector<1x256xbf16>, vector<256x128xbf16>, vector<1x128xf32> -> vector<1x128xf32>
    %c0_3 = arith.constant 0 : index
    %c0_4 = arith.constant 0 : index
    %4 = vector.load %arg3[%c0_3, %c0_4] : memref<1x128xf32, #tpu.memory_space<vmem>>, vector<1x128xf32>
    %5 = arith.addf %3, %4 : vector<1x128xf32>
    %cst_5 = arith.constant dense<0xFF800000> : vector<1xf32>
    %6 = vector.multi_reduction <maximumf>, %5, %cst_5 [1] : vector<1x128xf32> to vector<1xf32>
    %7 = vector.shape_cast %6 : vector<1xf32> to vector<1x1xf32>
    %8 = vector.broadcast %7 : vector<1x1xf32> to vector<1x128xf32>
    %9 = arith.subf %5, %8 : vector<1x128xf32>
    %10 = math.exp %9 : vector<1x128xf32>
    %cst_6 = arith.constant dense<0.000000e+00> : vector<1xf32>
    %11 = vector.multi_reduction <add>, %10, %cst_6 [1] : vector<1x128xf32> to vector<1xf32>
    %12 = vector.shape_cast %11 : vector<1xf32> to vector<1x1xf32>
    %13 = tpu.reciprocal %12 {approx = true} : vector<1x1xf32> -> vector<1x1xf32>
    %14 = vector.extract_strided_slice %10 {offsets = [0, 0], sizes = [1, 10], strides = [1, 1]} : vector<1x128xf32> to vector<1x10xf32>
    %15 = vector.broadcast %13 : vector<1x1xf32> to vector<1x10xf32>
    %16 = arith.mulf %14, %15 : vector<1x10xf32>
    %c0_7 = arith.constant 0 : index
    %c0_8 = arith.constant 0 : index
    %17 = vector.load %arg4[%c0_7, %c0_8] : memref<1x10xf32, #tpu.memory_space<vmem>>, vector<1x10xf32>
    tpu.vector_store %arg4[%c0_7, %c0_8], %16 {strides = array<i32>} : memref<1x10xf32, #tpu.memory_space<vmem>>, vector<1x10xf32>,
    return
  }
  func.func @transform_0(%arg0: i32) -> (i32, i32) {
    %c0_i32 = arith.constant 0 : i32
    %c0_i32_0 = arith.constant 0 : i32
    return %arg0, %c0_i32 : i32, i32
  }
  func.func @transform_1(%arg0: i32) -> (i32, i32) {
    %c0_i32 = arith.constant 0 : i32
    %c0_i32_0 = arith.constant 0 : i32
    %c0_i32_1 = arith.constant 0 : i32
    return %c0_i32, %c0_i32_0 : i32, i32
  }
  func.func @transform_2(%arg0: i32) -> (i32, i32) {
    %c0_i32 = arith.constant 0 : i32
    %c0_i32_0 = arith.constant 0 : i32
    %c0_i32_1 = arith.constant 0 : i32
    return %c0_i32, %c0_i32_0 : i32, i32
  }
  func.func @transform_3(%arg0: i32) -> (i32, i32) {
    %c0_i32 = arith.constant 0 : i32
    %c0_i32_0 = arith.constant 0 : i32
    return %arg0, %c0_i32 : i32, i32
  }
}

</mosaic_0001>

<llo_original>
// kernel: neural_model_forward.1
$region0: #{neural_model_forward.1}
  #allocation0 [shape = 'u32[]', space=smem, size = 0x4, offset = 0x4, fixed_abs, tag = 'smem constant byte address 0x4 - core index']
  #allocation1 [shape = 'u32[72,128]{1,0:T(1,128)}', space=vmem, size = 0x9000, scoped, tag = 'internal scratch']
  %s0 = inlined_call_operand.vmem [shape: f32[1,256], index: 0, kind: input, shape index: {}]
  %s1 = inlined_call_operand.vmem [shape: bf16[256,128], index: 1, kind: input, shape index: {}]
  %s2 = inlined_call_operand.vmem [shape: f32[1,128], index: 2, kind: input, shape index: {}]
  %s3 = inlined_call_operand.hbm [shape: f32[1,10], index: 3, kind: output, shape index: {}]
  %s4 = sld [smem:[#allocation0]]
  $region22: #{neural_model_forward.1} parent=0
    _
  %s6 = ssub.s32 1, %s4
  %s7 = scalar_select 0, %s6, %s4
  $region1: #{neural_model_forward.1} parent=0
    #allocation2 [shape = 'u8[512]{0}', space=vmem, size = 0x400, scoped, tag = 'output window, operand 0, single buffered']
    #allocation3 [shape = 's32[1]{0}', space=sflag, size = 0x4, scoped, tag = 'scoped memory for neural_model_forward.1']
    %8 = vsyncpa [#allocation3], 0
    // Predicated region
    $region2: #{neural_model_forward.1} parent=1 // pred_check
      _
    $region3: #{neural_model_forward.1} parent=1 // pred_check_branch
      %10 = sbr.rel (0) target = $region5
    $region4: #{neural_model_forward.1} parent=1 // pred_region
      _
    $region5: #{neural_model_forward.1} parent=1 // pred_fallthru
      _
    // Predicated region
    $region6: #{neural_model_forward.1} parent=1 // pred_check
      _
    $region7: #{neural_model_forward.1} parent=1 // pred_check_branch
      %12 = sbr.rel (0) target = $region9
    $region8: #{neural_model_forward.1} parent=1 // pred_region
      _
    $region9: #{neural_model_forward.1} parent=1 // pred_fallthru
      _
    // Predicated region
    $region10: #{neural_model_forward.1} parent=1 // pred_check
      _
    $region11: #{neural_model_forward.1} parent=1 // pred_check_branch
      %14 = sbr.rel (0) target = $region13
    $region12: #{neural_model_forward.1} parent=1 // pred_region
      _
    $region13: #{neural_model_forward.1} parent=1 // pred_fallthru
      _
    %v15 = vld [vmem:[%s0] sm:$0x3]
    %v17 = vperm.slane %v15, 0
    %v18 = vperm.slane %v15, 1
    %v21 = vpack.c.bf16 %v17, %v17
    %v22 = vpack.c.bf16 %v18, %v18
    %v23 = vld [vmem:[%s1] sm:$0xf]
    %v24 = vld [vmem:[%s1 + $0x4] sm:$0xf]
    %v25 = vld [vmem:[%s1 + $0x8] sm:$0xf]
    %v26 = vld [vmem:[%s1 + $0xc] sm:$0xf]
    %v27 = vld [vmem:[%s1 + $0x10] sm:$0xf]
    %v28 = vld [vmem:[%s1 + $0x14] sm:$0xf]
    %v29 = vld [vmem:[%s1 + $0x18] sm:$0xf]
    %v30 = vld [vmem:[%s1 + $0x1c] sm:$0xf]
    %v31 = vld [vmem:[%s1 + $0x20] sm:$0xf]
    %v32 = vld [vmem:[%s1 + $0x24] sm:$0xf]
    %v33 = vld [vmem:[%s1 + $0x28] sm:$0xf]
    %v34 = vld [vmem:[%s1 + $0x2c] sm:$0xf]
    %v35 = vld [vmem:[%s1 + $0x30] sm:$0xf]
    %v36 = vld [vmem:[%s1 + $0x34] sm:$0xf]
    %v37 = vld [vmem:[%s1 + $0x38] sm:$0xf]
    %v38 = vld [vmem:[%s1 + $0x3c] sm:$0xf]
    %v39 = vld [vmem:[%s1 + $0x40] sm:$0xf]
    %v40 = vld [vmem:[%s1 + $0x44] sm:$0xf]
    %v41 = vld [vmem:[%s1 + $0x48] sm:$0xf]
    %v42 = vld [vmem:[%s1 + $0x4c] sm:$0xf]
    %v43 = vld [vmem:[%s1 + $0x50] sm:$0xf]
    %v44 = vld [vmem:[%s1 + $0x54] sm:$0xf]
    %v45 = vld [vmem:[%s1 + $0x58] sm:$0xf]
    %v46 = vld [vmem:[%s1 + $0x5c] sm:$0xf]
    %v47 = vld [vmem:[%s1 + $0x60] sm:$0xf]
    %v48 = vld [vmem:[%s1 + $0x64] sm:$0xf]
    %v49 = vld [vmem:[%s1 + $0x68] sm:$0xf]
    %v50 = vld [vmem:[%s1 + $0x6c] sm:$0xf]
    %v51 = vld [vmem:[%s1 + $0x70] sm:$0xf]
    %v52 = vld [vmem:[%s1 + $0x74] sm:$0xf]
    %v53 = vld [vmem:[%s1 + $0x78] sm:$0xf]
    %v54 = vld [vmem:[%s1 + $0x7c] sm:$0xf]
    %v55 = vld [vmem:[%s2] sm:$0x1]
    %v88 = vunpack.c.l.b16 %v23
    %v89 = vunpack.c.l.b16 %v24
    %v90 = vunpack.c.l.b16 %v25
    %v91 = vunpack.c.l.b16 %v26
    %v92 = vunpack.c.l.b16 %v27
    %v93 = vunpack.c.l.b16 %v28
    %v94 = vunpack.c.l.b16 %v29
    %v95 = vunpack.c.l.b16 %v30
    %v96 = vunpack.c.l.b16 %v31
    %v97 = vunpack.c.l.b16 %v32
    %v98 = vunpack.c.l.b16 %v33
    %v99 = vunpack.c.l.b16 %v34
    %v100 = vunpack.c.l.b16 %v35
    %v101 = vunpack.c.l.b16 %v36
    %v102 = vunpack.c.l.b16 %v37
    %v103 = vunpack.c.l.b16 %v38
    %v104 = vunpack.c.l.b16 %v39
    %v105 = vunpack.c.l.b16 %v40
    %v106 = vunpack.c.l.b16 %v41
    %v107 = vunpack.c.l.b16 %v42
    %v108 = vunpack.c.l.b16 %v43
    %v109 = vunpack.c.l.b16 %v44
    %v110 = vunpack.c.l.b16 %v45
    %v111 = vunpack.c.l.b16 %v46
    %v112 = vunpack.c.l.b16 %v47
    %v113 = vunpack.c.l.b16 %v48
    %v114 = vunpack.c.l.b16 %v49
    %v115 = vunpack.c.l.b16 %v50
    %v116 = vunpack.c.l.b16 %v51
    %v117 = vunpack.c.l.b16 %v52
    %v118 = vunpack.c.l.b16 %v53
    %v119 = vunpack.c.l.b16 %v54
    %v120 = vpack.c.b16 %v89, %v88
    %v121 = vpack.c.b16 %v91, %v90
    %v122 = vpack.c.b16 %v93, %v92
    %v123 = vpack.c.b16 %v95, %v94
    %v124 = vpack.c.b16 %v97, %v96
    %v125 = vpack.c.b16 %v99, %v98
    %v126 = vpack.c.b16 %v101, %v100
    %v127 = vpack.c.b16 %v103, %v102
    %v128 = vpack.c.b16 %v105, %v104
    %v129 = vpack.c.b16 %v107, %v106
    %v130 = vpack.c.b16 %v109, %v108
    %v131 = vpack.c.b16 %v111, %v110
    %v132 = vpack.c.b16 %v113, %v112
    %v133 = vpack.c.b16 %v115, %v114
    %v134 = vpack.c.b16 %v117, %v116
    %v135 = vpack.c.b16 %v119, %v118
    %152 = vmatpush.bf16.msra.mxu0 %v127
    %153 = vmatpush.bf16.msra.mxu0 %v126
    %154 = vmatpush.bf16.msra.mxu0 %v125
    %155 = vmatpush.bf16.msra.mxu0 %v124
    %156 = vmatpush.bf16.msra.mxu0 %v123
    %157 = vmatpush.bf16.msra.mxu0 %v122
    %158 = vmatpush.bf16.msra.mxu0 %v121
    %159 = vmatpush.bf16.msra.mxu0 %v120
    %160 = vmatmul.bf16.gmra.mxu0 %v21
    %v161 = vpop.f32.mrf.mxu0
    %v162 = vadd.f32 %v55, %v161
    %v163 = vpop.f32.mrf.mxu0
    %164 = vdwg.mxu0
    %165 = vmatpush.bf16.msra.mxu0 %v135
    %166 = vmatpush.bf16.msra.mxu0 %v134
    %167 = vmatpush.bf16.msra.mxu0 %v133
    %168 = vmatpush.bf16.msra.mxu0 %v132
    %169 = vmatpush.bf16.msra.mxu0 %v131
    %170 = vmatpush.bf16.msra.mxu0 %v130
    %171 = vmatpush.bf16.msra.mxu0 %v129
    %172 = vmatpush.bf16.msra.mxu0 %v128
    %173 = vmatmul.bf16.gmra.mxu0 %v22
    %v174 = vpop.f32.mrf.mxu0
    %v175 = vadd.f32 %v162, %v174
    %v176 = vpop.f32.mrf.mxu0
    %177 = vdwg.mxu0
    %vm178 = vcmask 1040384
    %v179 = vsel %vm178, %v175, -inf
    %180 = vmax.xlane.f32.xlu0 %v179
    %v181 = vpop.xlane.xlu0 %180
    %v182 = vsub.f32 %v175, %v181
    %v183 = vmul.f32 %v182, 1.442695
    %v184 = vpow.pop %v183
    %v185 = vsel %vm178, %v184, 0.0
    %186 = vadd.xlane.f32.xlu0 %v185
    %v187 = vpop.xlane.xlu0 %186
    %v188 = vrcp.pop %v187
    %v189 = vmul.f32 %v184, %v188
    %vm190 = vcmask 73728
    %191 = vst.msk [vmem:[#allocation2] sm:$0x1] %vm190, %v189
    // Predicated region
    $region14: #{neural_model_forward.1} parent=1 // pred_check
      _
    $region15: #{neural_model_forward.1} parent=1 // pred_check_branch
      %193 = sbr.rel (0) target = $region17
    $region16: #{neural_model_forward.1} parent=1 // pred_region
      %195 = vsyncadd [#allocation3], 0
      %s197 = sshll.u32 [#allocation2], 4
      %s198 = int_to_ptr.vmem [resolvable:$true] %s197
      %s199 = sshll.u32 %s3, 4
      %s200 = int_to_ptr.hbm [resolvable:$true] %s199
      %202 = dma.vmem_to_hbm [thread:$0]  %s198, 16, %s200, [#allocation3]
    $region17: #{neural_model_forward.1} parent=1 // pred_fallthru
      _
    // Predicated region
    $region18: #{neural_model_forward.1} parent=1 // pred_check
      _
    $region19: #{neural_model_forward.1} parent=1 // pred_check_branch
      %204 = sbr.rel (0) target = $region21
    $region20: #{neural_model_forward.1} parent=1 // pred_region
      %206 = dma.done [#allocation3], 16
    $region21: #{neural_model_forward.1} parent=1 // pred_fallthru
      _
    %207 = vsyncpa [#allocation3], 1

</llo_original>
